<compile_context>
chip_gen: v6e
topology: v6e:2x2x1
jax: 0.10.0
libtpu: 0.0.40
codegen_flags: <defaults>
</compile_context>

<pallas_src>
import jax
import jax.numpy as jnp
from jax.experimental import pallas as pl
from jax.experimental.pallas import tpu as pltpu

HOR_IN = 14  # hor_in is hardcoded to 14 in the torch module


def _round_up(n, m):
    return (n + m - 1) // m * m


# -----------------------------------------------------------------------------
# Kernel: one TN-row tile of flattened patches per grid step.
#   a_ref : (1,) f32 in SMEM                    blend parameter
#   x_ref : (TN, Fin=14*patch_numel)            io dtype (f32 or bf16)
#   k0/k1 : folded Kronecker weights, resident  io dtype
#   b0/b1 : (1, Fout) folded biases (BN folded) f32
#   o_ref : (TN, Fout=14*ver_size)              io dtype
# -----------------------------------------------------------------------------
def _sep_part1_kernel(a_ref, x_ref, k0_ref, b0_ref, k1_ref, b1_ref, o_ref):
    a = a_ref[0]                                                  # scalar f32 (SMEM)
    x = x_ref[...]                                                # (TN, Fin)

    # layer 0:  relu(x @ K0 + b0)      K0 = kron fold of (W0_hor, W0_ver)
    h0 = jnp.dot(x, k0_ref[...], preferred_element_type=jnp.float32)
    x1 = jnp.maximum(h0 + b0_ref[...], 0.0)                       # (TN, Fout) f32

    # layer 1:  relu(x1 @ K1 + b1)     eval-mode BN folded into K1 / b1
    h1 = jnp.dot(x1.astype(k1_ref.dtype), k1_ref[...],
                 preferred_element_type=jnp.float32)
    x2 = jnp.maximum(h1 + b1_ref[...], 0.0)                       # (TN, Fout) f32

    o_ref[...] = (a * x1 + (1.0 - a) * x2).astype(o_ref.dtype)


def separable_part1(x, folded, *, tn=1024, io_dtype=jnp.float32,
                    vmem_limit_bytes=32 * 1024 * 1024):
    """x: (B, P, 14, patch_numel) f32. Returns (B, P, 14, ver_size) in io_dtype."""
    B, P, H, Vin = x.shape
    assert H == HOR_IN
    k0, k1 = folded["k0"], folded["k1"]
    Fin, Fout = k0.shape
    assert Fin == H * Vin and k1.shape == (Fout, Fout)
    ver = Fout // H
    N = B * P

    # TN: multiple of 8, capped to (padded) N. 512-2048 is the useful range;
    # v7x: keep N/TN >= 2 so both TensorCores are used.
    tn = max(8, (min(tn, _round_up(N, 8)) // 8) * 8)
    Np = _round_up(N, tn)
    grid = (Np // tn,)

    xf = x.reshape(N, Fin).astype(io_dtype)
    if Np != N:
        xf = jnp.pad(xf, ((0, Np - N), (0, 0)))

    a = folded["a"].reshape(1).astype(jnp.float32)
    k0c = k0.astype(io_dtype)
    k1c = k1.astype(io_dtype)
    b0 = folded["b0"].reshape(1, Fout).astype(jnp.float32)
    b1 = folded["b1"].reshape(1, Fout).astype(jnp.float32)

    out = pl.pallas_call(
        _sep_part1_kernel,
        out_shape=jax.ShapeDtypeStruct((Np, Fout), io_dtype),
        grid=grid,
        in_specs=[
            pl.BlockSpec(memory_space=pltpu.MemorySpace.SMEM),   # a (scalar path)
            pl.BlockSpec((tn, Fin), lambda i: (i, 0)),           # x tile
            pl.BlockSpec((Fin, Fout), lambda i: (0, 0)),         # K0 (resident)
            pl.BlockSpec((1, Fout), lambda i: (0, 0)),           # b0
            pl.BlockSpec((Fout, Fout), lambda i: (0, 0)),        # K1 (resident)
            pl.BlockSpec((1, Fout), lambda i: (0, 0)),           # b1
        ],
        out_specs=pl.BlockSpec((tn, Fout), lambda i: (i, 0)),
        compiler_params=pltpu.CompilerParams(
            dimension_semantics=("parallel",),
            vmem_limit_bytes=vmem_limit_bytes,
        ),
    )(a, xf, k0c, b0, k1c, b1)

    return out[:N].reshape(B, P, H, ver)


# -----------------------------------------------------------------------------
# Host-side parameter prep
# -----------------------------------------------------------------------------
def init_raw_params(key, patch_numel, ver_size, hor_size):
    # hor_size must be 14: VerHorBnRe1 is constructed with hor_in=14.
    assert hor_size == HOR_IN
    ks = jax.random.split(key, 10)
    w0_ver = 0.2 * jax.random.normal(ks[0], (ver_size, patch_numel), jnp.float32)
    w0_hor = 0.2 * jax.random.normal(ks[1], (hor_size, HOR_IN), jnp.float32)
    b0 = 0.1 * jax.random.normal(ks[2], (hor_size, ver_size), jnp.float32)
    w1_ver = 0.2 * jax.random.normal(ks[3], (ver_size, ver_size), jnp.float32)
    w1_hor = 0.2 * jax.random.normal(ks[4], (hor_size, HOR_IN), jnp.float32)
    b1 = 0.1 * jax.random.normal(ks[5], (hor_size, ver_size), jnp.float32)
    gamma = 1.0 + 0.1 * jax.random.normal(ks[6], (hor_size,), jnp.float32)
    beta = 0.1 * jax.random.normal(ks[7], (hor_size,), jnp.float32)
    run_mean = 0.1 * jax.random.normal(ks[8], (hor_size,), jnp.float32)
    run_var = jnp.abs(1.0 + 0.1 * jax.random.normal(ks[9], (hor_size,), jnp.float32))
    # torch init is a=0.0; use 0.25 so both residual branches are exercised.
    a = jnp.full((1,), 0.25, jnp.float32)
    return dict(w0_ver=w0_ver, w0_hor=w0_hor, b0=b0,
                w1_ver=w1_ver, w1_hor=w1_hor, b1=b1,
                bn_gamma=gamma, bn_beta=beta, bn_mean=run_mean, bn_var=run_var,
                bn_eps=1e-5, a=a)


def fold_params(raw):
    """Fold each (W_hor, W_ver) pair into one Kronecker weight; fold eval-mode BN."""
    ver = raw["w0_ver"].shape[0]

    def kron_fold(w_hor, w_ver):
        # K[h*Vin+v, g*Vout+w] = W_hor[g,h] * W_ver[w,v]
        h_out, h_in = w_hor.shape
        v_out, v_in = w_ver.shape
        return jnp.einsum("gh,wv->hvgw", w_hor, w_ver).reshape(h_in * v_in,
                                                               h_out * v_out)

    k0 = kron_fold(raw["w0_hor"], raw["w0_ver"])
    b0 = raw["b0"].reshape(-1)
    k1 = kron_fold(raw["w1_hor"], raw["w1_ver"])
    b1 = raw["b1"].reshape(-1)

    bn_scale = raw["bn_gamma"] / jnp.sqrt(raw["bn_var"] + raw["bn_eps"])
    bn_shift = raw["bn_beta"] - raw["bn_mean"] * bn_scale
    scale_f = jnp.repeat(bn_scale, ver)
    shift_f = jnp.repeat(bn_shift, ver)
    k1 = k1 * scale_f[None, :]
    b1 = b1 * scale_f + shift_f
    return dict(k0=k0, b0=b0, k1=k1, b1=b1, a=raw["a"])


# -----------------------------------------------------------------------------
# Pure-JAX references
# -----------------------------------------------------------------------------
def reference_separable(x, raw):
    """Mirrors the torch forward (separable structure), full-precision f32."""
    hi = jax.lax.Precision.HIGHEST
    y0 = jnp.einsum("bphv,wv->bphw", x, raw["w0_ver"], precision=hi)
    z0 = jnp.einsum("gh,bphw->bpgw", raw["w0_hor"], y0, precision=hi) + raw["b0"]
    x1 = jnp.maximum(z0, 0.0)
    y1 = jnp.einsum("bphv,wv->bphw", x1, raw["w1_ver"], precision=hi)
    z1 = jnp.einsum("gh,bphw->bpgw", raw["w1_hor"], y1, precision=hi) + raw["b1"]
    bn_scale = raw["bn_gamma"] / jnp.sqrt(raw["bn_var"] + raw["bn_eps"])
    bn_shift = raw["bn_beta"] - raw["bn_mean"] * bn_scale
    z1 = z1 * bn_scale[:, None] + bn_shift[:, None]
    x2 = jnp.maximum(z1, 0.0)
    a = raw["a"][0]
    return a * x1 + (1.0 - a) * x2


def reference_folded(x, folded, io_dtype=jnp.float32, precision=None):
    """Mirrors the kernel math exactly (folded weights, io_dtype matmul operands)."""
    B, P, H, Vin = x.shape
    Fout = folded["k0"].shape[1]
    ver = Fout // H
    xf = x.reshape(B * P, H * Vin).astype(io_dtype)
    k0 = folded["k0"].astype(io_dtype)
    k1 = folded["k1"].astype(io_dtype)
    h0 = jnp.dot(xf, k0, preferred_element_type=jnp.float32, precision=precision)
    x1 = jnp.maximum(h0 + folded["b0"][None, :], 0.0)
    h1 = jnp.dot(x1.astype(io_dtype), k1, preferred_element_type=jnp.float32,
                 precision=precision)
    x2 = jnp.maximum(h1 + folded["b1"][None, :], 0.0)
    a = folded["a"][0]
    out = (a * x1 + (1.0 - a) * x2).astype(io_dtype)
    return out.reshape(B, P, H, ver)


if __name__ == "__main__":
    key = jax.random.PRNGKey(0)
    kx, kp = jax.random.split(key)

    B, P = 2, 8                 # batch, number of patches  -> N = 16 samples
    patch_numel = 25            # 5x5 grayscale patch
    ver_size = 32
    hor_size = 14               # must equal 14

    x = jax.random.normal(kx, (B, P, HOR_IN, patch_numel), dtype=jnp.float32)
    raw = init_raw_params(kp, patch_numel, ver_size, hor_size)
    folded = fold_params(raw)

    # 1) The Kronecker/BN fold matches the torch-style separable math (pure JAX, f32).
    ref_sep = reference_separable(x, raw)
    ref_fold_hi = reference_folded(x, folded, jnp.float32,
                                   precision=jax.lax.Precision.HIGHEST)
    if not jnp.allclose(ref_sep, ref_fold_hi, atol=1e-4, rtol=1e-4):
        raise AssertionError("Kronecker/BN weight folding mismatch vs separable reference")

    # 2) f32 Pallas kernel vs structurally identical JAX reference.
    out_f32 = jax.block_until_ready(separable_part1(x, folded, io_dtype=jnp.float32))
    assert out_f32.shape == (B, P, hor_size, ver_size)
    ref_fold = reference_folded(x, folded, jnp.float32)
    if not jnp.allclose(out_f32, ref_fold, atol=2e-3, rtol=2e-3):
        raise AssertionError("f32 Pallas kernel mismatch vs folded JAX reference")

    # 3) bf16-I/O path (recommended on v6e/v7x; f32 accumulation and elementwise).
    out_bf16 = jax.block_until_ready(separable_part1(x, folded, io_dtype=jnp.bfloat16))
    ref_bf16 = reference_folded(x, folded, jnp.bfloat16)
    if not jnp.allclose(out_bf16.astype(jnp.float32), ref_bf16.astype(jnp.float32),
                        atol=1e-2, rtol=1e-2):
        raise AssertionError("bf16 Pallas kernel mismatch vs folded bf16 JAX reference")

    print("KERNEL_OK")
</pallas_src>

<mosaic_0001>
module attributes {stable_mosaic.version = 11 : i64} {
  func.func @_sep_part1_kernel(%arg0: i32, %arg1: memref<1xf32, #tpu.memory_space<smem>>, %arg2: memref<16x350xf32, #tpu.memory_space<vmem>>, %arg3: memref<350x448xf32, #tpu.memory_space<vmem>>, %arg4: memref<1x448xf32, #tpu.memory_space<vmem>>, %arg5: memref<448x448xf32, #tpu.memory_space<vmem>>, %arg6: memref<1x448xf32, #tpu.memory_space<vmem>>, %arg7: memref<16x448xf32, #tpu.memory_space<vmem>>) attributes {dimension_semantics = [#tpu.dimension_semantics<parallel>], iteration_bounds = array<i64: 1>, scalar_prefetch = 0 : i64, scratch_operands = 0 : i64, tpu.core_type = #tpu.core_type<tc>, window_params = [{transform_indices = @transform_0, window_bounds = array<i64: 1>}, {transform_indices = @transform_1, window_bounds = array<i64: 16, 350>}, {pipeline_mode = #tpu.pipeline_mode<synchronous>, transform_indices = @transform_2, window_bounds = array<i64: 350, 448>}, {pipeline_mode = #tpu.pipeline_mode<synchronous>, transform_indices = @transform_3, window_bounds = array<i64: 1, 448>}, {pipeline_mode = #tpu.pipeline_mode<synchronous>, transform_indices = @transform_4, window_bounds = array<i64: 448, 448>}, {pipeline_mode = #tpu.pipeline_mode<synchronous>, transform_indices = @transform_5, window_bounds = array<i64: 1, 448>}, {transform_indices = @transform_6, window_bounds = array<i64: 16, 448>}]} {
    %c0 = arith.constant 0 : index
    %0 = memref.load %arg1[%c0] : memref<1xf32, #tpu.memory_space<smem>>
    %c0_0 = arith.constant 0 : index
    %c0_1 = arith.constant 0 : index
    %1 = vector.load %arg2[%c0_0, %c0_1] : memref<16x350xf32, #tpu.memory_space<vmem>>, vector<16x350xf32>
    %c0_2 = arith.constant 0 : index
    %c0_3 = arith.constant 0 : index
    %2 = vector.load %arg3[%c0_2, %c0_3] : memref<350x448xf32, #tpu.memory_space<vmem>>, vector<350x448xf32>
    %cst = arith.constant dense<0.000000e+00> : vector<16x448xf32>
    %3 = tpu.matmul %1, %2, %cst {dimension_numbers = #tpu.dot_dimension_numbers<[1], [0], [0], [1], [0, 0, 1, 1], [], []>} : vector<16x350xf32>, vector<350x448xf32>, vector<16x448xf32> -> vector<16x448xf32>
    %c0_4 = arith.constant 0 : index
    %c0_5 = arith.constant 0 : index
    %4 = vector.load %arg4[%c0_4, %c0_5] : memref<1x448xf32, #tpu.memory_space<vmem>>, vector<1x448xf32>
    %5 = vector.broadcast %4 : vector<1x448xf32> to vector<16x448xf32>
    %6 = arith.addf %3, %5 : vector<16x448xf32>
    %cst_6 = arith.constant 0.000000e+00 : f32
    %7 = vector.broadcast %cst_6 : f32 to vector<16x448xf32>
    %8 = arith.maximumf %6, %7 : vector<16x448xf32>
    %c0_7 = arith.constant 0 : index
    %c0_8 = arith.constant 0 : index
    %9 = vector.load %arg5[%c0_7, %c0_8] : memref<448x448xf32, #tpu.memory_space<vmem>>, vector<448x448xf32>
    %cst_9 = arith.constant dense<0.000000e+00> : vector<16x448xf32>
    %10 = tpu.matmul %8, %9, %cst_9 {dimension_numbers = #tpu.dot_dimension_numbers<[1], [0], [0], [1], [0, 0, 1, 1], [], []>} : vector<16x448xf32>, vector<448x448xf32>, vector<16x448xf32> -> vector<16x448xf32>
    %c0_10 = arith.constant 0 : index
    %c0_11 = arith.constant 0 : index
    %11 = vector.load %arg6[%c0_10, %c0_11] : memref<1x448xf32, #tpu.memory_space<vmem>>, vector<1x448xf32>
    %12 = vector.broadcast %11 : vector<1x448xf32> to vector<16x448xf32>
    %13 = arith.addf %10, %12 : vector<16x448xf32>
    %cst_12 = arith.constant 0.000000e+00 : f32
    %14 = vector.broadcast %cst_12 : f32 to vector<16x448xf32>
    %15 = arith.maximumf %13, %14 : vector<16x448xf32>
    %16 = vector.broadcast %0 : f32 to vector<16x448xf32>
    %17 = arith.mulf %16, %8 : vector<16x448xf32>
    %cst_13 = arith.constant 1.000000e+00 : f32
    %18 = arith.subf %cst_13, %0 : f32
    %19 = vector.broadcast %18 : f32 to vector<16x448xf32>
    %20 = arith.mulf %19, %15 : vector<16x448xf32>
    %21 = arith.addf %17, %20 : vector<16x448xf32>
    %c0_14 = arith.constant 0 : index
    %c0_15 = arith.constant 0 : index
    %22 = vector.load %arg7[%c0_14, %c0_15] : memref<16x448xf32, #tpu.memory_space<vmem>>, vector<16x448xf32>
    tpu.vector_store %arg7[%c0_14, %c0_15], %21 {strides = array<i32>} : memref<16x448xf32, #tpu.memory_space<vmem>>, vector<16x448xf32>,
    return
  }
  func.func @transform_0(%arg0: i32) -> i32 {
    %c0_i32 = arith.constant 0 : i32
    %c0_i32_0 = arith.constant 0 : i32
    return %c0_i32 : i32
  }
  func.func @transform_1(%arg0: i32) -> (i32, i32) {
    %c0_i32 = arith.constant 0 : i32
    %c0_i32_0 = arith.constant 0 : i32
    return %arg0, %c0_i32 : i32, i32
  }
  func.func @transform_2(%arg0: i32) -> (i32, i32) {
    %c0_i32 = arith.constant 0 : i32
    %c0_i32_0 = arith.constant 0 : i32
    %c0_i32_1 = arith.constant 0 : i32
    return %c0_i32, %c0_i32_0 : i32, i32
  }
  func.func @transform_3(%arg0: i32) -> (i32, i32) {
    %c0_i32 = arith.constant 0 : i32
    %c0_i32_0 = arith.constant 0 : i32
    %c0_i32_1 = arith.constant 0 : i32
    return %c0_i32, %c0_i32_0 : i32, i32
  }
  func.func @transform_4(%arg0: i32) -> (i32, i32) {
    %c0_i32 = arith.constant 0 : i32
    %c0_i32_0 = arith.constant 0 : i32
    %c0_i32_1 = arith.constant 0 : i32
    return %c0_i32, %c0_i32_0 : i32, i32
  }
  func.func @transform_5(%arg0: i32) -> (i32, i32) {
    %c0_i32 = arith.constant 0 : i32
    %c0_i32_0 = arith.constant 0 : i32
    %c0_i32_1 = arith.constant 0 : i32
    return %c0_i32, %c0_i32_0 : i32, i32
  }
  func.func @transform_6(%arg0: i32) -> (i32, i32) {
    %c0_i32 = arith.constant 0 : i32
    %c0_i32_0 = arith.constant 0 : i32
    return %arg0, %c0_i32 : i32, i32
  }
}

</mosaic_0001>

<llo_original>
// kernel: tpu_custom_call.1
$region0: #{tpu_custom_call.1}
  #allocation0 [shape = 'u32[]', space=smem, size = 0x4, offset = 0x4, fixed_abs, tag = 'smem constant byte address 0x4 - core index']
  #allocation1 [shape = 'u32[144,128]{1,0:T(1,128)}', space=vmem, size = 0x12000, scoped, tag = 'internal scratch']
  #allocation2 [shape = 'f32[1]{0:T(128)S(6)}', space=smem, size = 0x200, scoped, tag = 'scoped memory for tpu_custom_call.1']
  %s0 = inlined_call_operand.<no memory space> [shape: f32[1], index: 0, kind: input, shape index: {}]
  %s1 = inlined_call_operand.vmem [shape: f32[16,350], index: 1, kind: input, shape index: {}]
  %s2 = inlined_call_operand.vmem [shape: f32[350,448], index: 2, kind: input, shape index: {}]
  %s3 = inlined_call_operand.vmem [shape: f32[1,448], index: 3, kind: input, shape index: {}]
  %s4 = inlined_call_operand.vmem [shape: f32[448,448], index: 4, kind: input, shape index: {}]
  %s5 = inlined_call_operand.vmem [shape: f32[1,448], index: 5, kind: input, shape index: {}]
  %s6 = inlined_call_operand.hbm [shape: f32[16,448], index: 6, kind: output, shape index: {}]
  %s7 = sld [smem:[#allocation0]]
  $region34: #{tpu_custom_call.1} parent=0
    _
  %s9 = ssub.s32 1, %s7
  %s10 = scalar_select 0, %s9, %s7
  %11 = sst [smem:[#allocation2]] %s0
  $region1: #{tpu_custom_call.1} parent=0
    #allocation3 [shape = 'u8[32768]{0}', space=vmem, size = 0x8000, scoped, tag = 'output window, operand 0, single buffered']
    #allocation4 [shape = 's32[1]{0}', space=sflag, size = 0x4, scoped, tag = 'scoped memory for tpu_custom_call.1']
    %12 = vsyncpa [#allocation4], 0
    // Predicated region
    $region2: #{tpu_custom_call.1} parent=1 // pred_check
      _
    $region3: #{tpu_custom_call.1} parent=1 // pred_check_branch
      %14 = sbr.rel (0) target = $region5
    $region4: #{tpu_custom_call.1} parent=1 // pred_region
      _
    $region5: #{tpu_custom_call.1} parent=1 // pred_fallthru
      _
    // Predicated region
    $region6: #{tpu_custom_call.1} parent=1 // pred_check
      _
    $region7: #{tpu_custom_call.1} parent=1 // pred_check_branch
      %16 = sbr.rel (0) target = $region9
    $region8: #{tpu_custom_call.1} parent=1 // pred_region
      _
    $region9: #{tpu_custom_call.1} parent=1 // pred_fallthru
      _
    // Predicated region
    $region10: #{tpu_custom_call.1} parent=1 // pred_check
      _
    $region11: #{tpu_custom_call.1} parent=1 // pred_check_branch
      %18 = sbr.rel (0) target = $region13
    $region12: #{tpu_custom_call.1} parent=1 // pred_region
      _
    $region13: #{tpu_custom_call.1} parent=1 // pred_fallthru
      _
    // Predicated region
    $region14: #{tpu_custom_call.1} parent=1 // pred_check
      _
    $region15: #{tpu_custom_call.1} parent=1 // pred_check_branch
      %20 = sbr.rel (0) target = $region17
    $region16: #{tpu_custom_call.1} parent=1 // pred_region
      _
    $region17: #{tpu_custom_call.1} parent=1 // pred_fallthru
      _
    // Predicated region
    $region18: #{tpu_custom_call.1} parent=1 // pred_check
      _
    $region19: #{tpu_custom_call.1} parent=1 // pred_check_branch
      %22 = sbr.rel (0) target = $region21
    $region20: #{tpu_custom_call.1} parent=1 // pred_region
      _
    $region21: #{tpu_custom_call.1} parent=1 // pred_fallthru
      _
    // Predicated region
    $region22: #{tpu_custom_call.1} parent=1 // pred_check
      _
    $region23: #{tpu_custom_call.1} parent=1 // pred_check_branch
      %24 = sbr.rel (0) target = $region25
    $region24: #{tpu_custom_call.1} parent=1 // pred_region
      _
    $region25: #{tpu_custom_call.1} parent=1 // pred_fallthru
      _
    %s25 = sld [smem:[#allocation2]]
    %v26 = vld [vmem:[%s1] sm:$0xff]
    %v27 = vld [vmem:[%s1 + $0x8] sm:$0xff]
    %v28 = vld [vmem:[%s1 + $0x10] sm:$0xff]
    %v29 = vld [vmem:[%s1 + $0x18] sm:$0xff]
    %v30 = vld [vmem:[%s1 + $0x20] sm:$0xff]
    %v31 = vld [vmem:[%s1 + $0x28] sm:$0xff]
    %v32 = vld [vmem:[%s2] sm:$0xff]
    %v33 = vld [vmem:[%s2 + $0x8] sm:$0xff]
    %v34 = vld [vmem:[%s2 + $0x10] sm:$0xff]
    %v35 = vld [vmem:[%s2 + $0x18] sm:$0xff]
    %v36 = vld [vmem:[%s2 + $0x20] sm:$0xff]
    %v37 = vld [vmem:[%s2 + $0x28] sm:$0xff]
    %v38 = vld [vmem:[%s2 + $0x30] sm:$0xff]
    %v39 = vld [vmem:[%s2 + $0x38] sm:$0xff]
    %v40 = vld [vmem:[%s2 + $0x40] sm:$0xff]
    %v41 = vld [vmem:[%s2 + $0x48] sm:$0xff]
    %v42 = vld [vmem:[%s2 + $0x50] sm:$0xff]
    %v43 = vld [vmem:[%s2 + $0x58] sm:$0xff]
    %v44 = vld [vmem:[%s2 + $0x60] sm:$0xff]
    %v45 = vld [vmem:[%s2 + $0x68] sm:$0xff]
    %v46 = vld [vmem:[%s2 + $0x70] sm:$0xff]
    %v47 = vld [vmem:[%s2 + $0x78] sm:$0xff]
    %v48 = vld [vmem:[%s2 + $0x80] sm:$0xff]
    %v49 = vld [vmem:[%s2 + $0x88] sm:$0xff]
    %v50 = vld [vmem:[%s2 + $0x90] sm:$0xff]
    %v51 = vld [vmem:[%s2 + $0x98] sm:$0xff]
    %v52 = vld [vmem:[%s2 + $0xa0] sm:$0xff]
    %v53 = vld [vmem:[%s2 + $0xa8] sm:$0xff]
    %v54 = vld [vmem:[%s2 + $0xb0] sm:$0xff]
    %v55 = vld [vmem:[%s2 + $0xb8] sm:$0xff]
    %v56 = vld [vmem:[%s2 + $0xc0] sm:$0xff]
    %v57 = vld [vmem:[%s2 + $0xc8] sm:$0xff]
    %v58 = vld [vmem:[%s2 + $0xd0] sm:$0xff]
    %v59 = vld [vmem:[%s2 + $0xd8] sm:$0xff]
    %v60 = vld [vmem:[%s2 + $0xe0] sm:$0xff]
    %v61 = vld [vmem:[%s2 + $0xe8] sm:$0xff]
    %v62 = vld [vmem:[%s2 + $0xf0] sm:$0xff]
    %v63 = vld [vmem:[%s2 + $0xf8] sm:$0xff]
    %v64 = vld [vmem:[%s2 + $0x100] sm:$0xff]
    %v65 = vld [vmem:[%s2 + $0x108] sm:$0xff]
    %v66 = vld [vmem:[%s2 + $0x110] sm:$0xff]
    %v67 = vld [vmem:[%s2 + $0x118] sm:$0xff]
    %v68 = vld [vmem:[%s2 + $0x120] sm:$0xff]
    %v69 = vld [vmem:[%s2 + $0x128] sm:$0xff]
    %v70 = vld [vmem:[%s2 + $0x130] sm:$0xff]
    %v71 = vld [vmem:[%s2 + $0x138] sm:$0xff]
    %v72 = vld [vmem:[%s2 + $0x140] sm:$0xff]
    %v73 = vld [vmem:[%s2 + $0x148] sm:$0xff]
    %v74 = vld [vmem:[%s2 + $0x150] sm:$0xff]
    %v75 = vld [vmem:[%s2 + $0x158] sm:$0xff]
    %v76 = vld [vmem:[%s2 + $0x160] sm:$0xff]
    %v77 = vld [vmem:[%s2 + $0x168] sm:$0xff]
    %v78 = vld [vmem:[%s2 + $0x170] sm:$0xff]
    %v79 = vld [vmem:[%s2 + $0x178] sm:$0xff]
    %v80 = vld [vmem:[%s2 + $0x180] sm:$0xff]
    %v81 = vld [vmem:[%s2 + $0x188] sm:$0xff]
    %v82 = vld [vmem:[%s2 + $0x190] sm:$0xff]
    %v83 = vld [vmem:[%s2 + $0x198] sm:$0xff]
    %v84 = vld [vmem:[%s2 + $0x1a0] sm:$0xff]
    %v85 = vld [vmem:[%s2 + $0x1a8] sm:$0xff]
    %v86 = vld [vmem:[%s2 + $0x1b0] sm:$0xff]
    %v87 = vld [vmem:[%s2 + $0x1b8] sm:$0xff]
    %v88 = vld [vmem:[%s2 + $0x1c0] sm:$0xff]
    %v89 = vld [vmem:[%s2 + $0x1c8] sm:$0xff]
    %v90 = vld [vmem:[%s2 + $0x1d0] sm:$0xff]
    %v91 = vld [vmem:[%s2 + $0x1d8] sm:$0xff]
    %v92 = vld [vmem:[%s2 + $0x1e0] sm:$0xff]
    %v93 = vld [vmem:[%s2 + $0x1e8] sm:$0xff]
    %v94 = vld [vmem:[%s2 + $0x1f0] sm:$0xff]
    %v95 = vld [vmem:[%s2 + $0x1f8] sm:$0xff]
    %v96 = vld [vmem:[%s2 + $0x200] sm:$0xff]
    %v97 = vld [vmem:[%s2 + $0x208] sm:$0xff]
    %v98 = vld [vmem:[%s2 + $0x210] sm:$0xff]
    %v99 = vld [vmem:[%s2 + $0x218] sm:$0xff]
    %v100 = vld [vmem:[%s2 + $0x220] sm:$0xff]
    %v101 = vld [vmem:[%s2 + $0x228] sm:$0xff]
    %v102 = vld [vmem:[%s2 + $0x230] sm:$0xff]
    %v103 = vld [vmem:[%s2 + $0x238] sm:$0xff]
    %v104 = vld [vmem:[%s2 + $0x240] sm:$0xff]
    %v105 = vld [vmem:[%s2 + $0x248] sm:$0xff]
    %v106 = vld [vmem:[%s2 + $0x250] sm:$0xff]
    %v107 = vld [vmem:[%s2 + $0x258] sm:$0xff]
    %v108 = vld [vmem:[%s2 + $0x260] sm:$0xff]
    %v109 = vld [vmem:[%s2 + $0x268] sm:$0xff]
    %v110 = vld [vmem:[%s2 + $0x270] sm:$0xff]
    %v111 = vld [vmem:[%s2 + $0x278] sm:$0xff]
    %v112 = vld [vmem:[%s2 + $0x280] sm:$0xff]
    %v113 = vld [vmem:[%s2 + $0x288] sm:$0xff]
    %v114 = vld [vmem:[%s2 + $0x290] sm:$0xff]
    %v115 = vld [vmem:[%s2 + $0x298] sm:$0xff]
    %v116 = vld [vmem:[%s2 + $0x2a0] sm:$0xff]
    %v117 = vld [vmem:[%s2 + $0x2a8] sm:$0xff]
    %v118 = vld [vmem:[%s2 + $0x2b0] sm:$0xff]
    %v119 = vld [vmem:[%s2 + $0x2b8] sm:$0xff]
    %v120 = vld [vmem:[%s2 + $0x2c0] sm:$0xff]
    %v121 = vld [vmem:[%s2 + $0x2c8] sm:$0xff]
    %v122 = vld [vmem:[%s2 + $0x2d0] sm:$0xff]
    %v123 = vld [vmem:[%s2 + $0x2d8] sm:$0xff]
    %v124 = vld [vmem:[%s2 + $0x2e0] sm:$0xff]
    %v125 = vld [vmem:[%s2 + $0x2e8] sm:$0xff]
    %v126 = vld [vmem:[%s2 + $0x2f0] sm:$0xff]
    %v127 = vld [vmem:[%s2 + $0x2f8] sm:$0xff]
    %v128 = vld [vmem:[%s2 + $0x300] sm:$0xff]
    %v129 = vld [vmem:[%s2 + $0x308] sm:$0xff]
    %v130 = vld [vmem:[%s2 + $0x310] sm:$0xff]
    %v131 = vld [vmem:[%s2 + $0x318] sm:$0xff]
    %v132 = vld [vmem:[%s2 + $0x320] sm:$0xff]
    %v133 = vld [vmem:[%s2 + $0x328] sm:$0xff]
    %v134 = vld [vmem:[%s2 + $0x330] sm:$0xff]
    %v135 = vld [vmem:[%s2 + $0x338] sm:$0xff]
    %v136 = vld [vmem:[%s2 + $0x340] sm:$0xff]
    %v137 = vld [vmem:[%s2 + $0x348] sm:$0xff]
    %v138 = vld [vmem:[%s2 + $0x350] sm:$0xff]
    %v139 = vld [vmem:[%s2 + $0x358] sm:$0xff]
    %v140 = vld [vmem:[%s2 + $0x360] sm:$0xff]
    %v141 = vld [vmem:[%s2 + $0x368] sm:$0xff]
    %v142 = vld [vmem:[%s2 + $0x370] sm:$0xff]
    %v143 = vld [vmem:[%s2 + $0x378] sm:$0xff]
    %v144 = vld [vmem:[%s2 + $0x380] sm:$0xff]
    %v145 = vld [vmem:[%s2 + $0x388] sm:$0xff]
    %v146 = vld [vmem:[%s2 + $0x390] sm:$0xff]
    %v147 = vld [vmem:[%s2 + $0x398] sm:$0xff]
    %v148 = vld [vmem:[%s2 + $0x3a0] sm:$0xff]
    %v149 = vld [vmem:[%s2 + $0x3a8] sm:$0xff]
    %v150 = vld [vmem:[%s2 + $0x3b0] sm:$0xff]
    %v151 = vld [vmem:[%s2 + $0x3b8] sm:$0xff]
    %v152 = vld [vmem:[%s2 + $0x3c0] sm:$0xff]
    %v153 = vld [vmem:[%s2 + $0x3c8] sm:$0xff]
    %v154 = vld [vmem:[%s2 + $0x3d0] sm:$0xff]
    %v155 = vld [vmem:[%s2 + $0x3d8] sm:$0xff]
    %v156 = vld [vmem:[%s2 + $0x3e0] sm:$0xff]
    %v157 = vld [vmem:[%s2 + $0x3e8] sm:$0xff]
    %v158 = vld [vmem:[%s2 + $0x3f0] sm:$0xff]
    %v159 = vld [vmem:[%s2 + $0x3f8] sm:$0xff]
    %v160 = vld [vmem:[%s2 + $0x400] sm:$0xff]
    %v161 = vld [vmem:[%s2 + $0x408] sm:$0xff]
    %v162 = vld [vmem:[%s2 + $0x410] sm:$0xff]
    %v163 = vld [vmem:[%s2 + $0x418] sm:$0xff]
    %v164 = vld [vmem:[%s2 + $0x420] sm:$0xff]
    %v165 = vld [vmem:[%s2 + $0x428] sm:$0xff]
    %v166 = vld [vmem:[%s2 + $0x430] sm:$0xff]
    %v167 = vld [vmem:[%s2 + $0x438] sm:$0xff]
    %v168 = vld [vmem:[%s2 + $0x440] sm:$0xff]
    %v169 = vld [vmem:[%s2 + $0x448] sm:$0xff]
    %v170 = vld [vmem:[%s2 + $0x450] sm:$0xff]
    %v171 = vld [vmem:[%s2 + $0x458] sm:$0xff]
    %v172 = vld [vmem:[%s2 + $0x460] sm:$0xff]
    %v173 = vld [vmem:[%s2 + $0x468] sm:$0xff]
    %v174 = vld [vmem:[%s2 + $0x470] sm:$0xff]
    %v175 = vld [vmem:[%s2 + $0x478] sm:$0xff]
    %v176 = vld [vmem:[%s2 + $0x480] sm:$0xff]
    %v177 = vld [vmem:[%s2 + $0x488] sm:$0xff]
    %v178 = vld [vmem:[%s2 + $0x490] sm:$0xff]
    %v179 = vld [vmem:[%s2 + $0x498] sm:$0xff]
    %v180 = vld [vmem:[%s2 + $0x4a0] sm:$0xff]
    %v181 = vld [vmem:[%s2 + $0x4a8] sm:$0xff]
    %v182 = vld [vmem:[%s2 + $0x4b0] sm:$0xff]
    %v183 = vld [vmem:[%s2 + $0x4b8] sm:$0xff]
    %v184 = vld [vmem:[%s2 + $0x4c0] sm:$0xff]
    %v185 = vld [vmem:[%s2 + $0x4c8] sm:$0xff]
    %v186 = vld [vmem:[%s2 + $0x4d0] sm:$0xff]
    %v187 = vld [vmem:[%s2 + $0x4d8] sm:$0xff]
    %v188 = vld [vmem:[%s2 + $0x4e0] sm:$0xff]
    %v189 = vld [vmem:[%s2 + $0x4e8] sm:$0xff]
    %v190 = vld [vmem:[%s2 + $0x4f0] sm:$0xff]
    %v191 = vld [vmem:[%s2 + $0x4f8] sm:$0xff]
    %v192 = vld [vmem:[%s2 + $0x500] sm:$0xff]
    %v193 = vld [vmem:[%s2 + $0x508] sm:$0xff]
    %v194 = vld [vmem:[%s2 + $0x510] sm:$0xff]
    %v195 = vld [vmem:[%s2 + $0x518] sm:$0xff]
    %v196 = vld [vmem:[%s2 + $0x520] sm:$0xff]
    %v197 = vld [vmem:[%s2 + $0x528] sm:$0xff]
    %v198 = vld [vmem:[%s2 + $0x530] sm:$0xff]
    %v199 = vld [vmem:[%s2 + $0x538] sm:$0xff]
    %v200 = vld [vmem:[%s2 + $0x540] sm:$0xff]
    %v201 = vld [vmem:[%s2 + $0x548] sm:$0xff]
    %v202 = vld [vmem:[%s2 + $0x550] sm:$0xff]
    %v203 = vld [vmem:[%s2 + $0x558] sm:$0xff]
    %v204 = vld [vmem:[%s2 + $0x560] sm:$0x3f]
    %v205 = vld [vmem:[%s2 + $0x568] sm:$0x3f]
    %v206 = vld [vmem:[%s2 + $0x570] sm:$0x3f]
    %v207 = vld [vmem:[%s2 + $0x578] sm:$0x3f]
    %v208 = vld [vmem:[%s3] sm:$0xf]
    %v210 = vlaneseq
    %v211 = vshrl.u32 %v210, 7
    %v212 = vsub.s32 0, %v211
    %v213 = vrot.slane %v208, %v212
    %v214 = vlaneseq
    %v215 = vshrl.u32 %v214, 7
    %v216 = vsub.s32 1, %v215
    %v217 = vrot.slane %v208, %v216
    %v218 = vlaneseq
    %v219 = vshrl.u32 %v218, 7
    %v220 = vsub.s32 2, %v219
    %v221 = vrot.slane %v208, %v220
    %v222 = vlaneseq
    %v223 = vshrl.u32 %v222, 7
    %v224 = vsub.s32 3, %v223
    %v225 = vrot.slane %v208, %v224
    %vm230 = vcmask 769024
    %v232 = vsel %vm230, %v28, 0
    %v235 = vsel %vm230, %v31, 0
    %vm237 = vcmask 1045504
    %v239 = vsel %vm237, %v204, 0
    %v242 = vsel %vm237, %v205, 0
    %v245 = vsel %vm237, %v206, 0
    %v248 = vsel %vm237, %v207, 0
    %250 = vmatprep.subr.mxu0 %v93
    %251 = vmatpush1.msra.mxu0 %v92
    %252 = vmatprep.subr.mxu0 %v89
    %253 = vmatpush1.msra.mxu0 %v88
    %254 = vmatprep.subr.mxu0 %v85
    %255 = vmatpush1.msra.mxu0 %v84
    %256 = vmatprep.subr.mxu0 %v81
    %257 = vmatpush1.msra.mxu0 %v80
    %258 = vmatprep.subr.mxu0 %v77
    %259 = vmatpush1.msra.mxu0 %v76
    %260 = vmatprep.subr.mxu0 %v73
    %261 = vmatpush1.msra.mxu0 %v72
    %262 = vmatprep.subr.mxu0 %v69
    %263 = vmatpush1.msra.mxu0 %v68
    %264 = vmatprep.subr.mxu0 %v65
    %265 = vmatpush1.msra.mxu0 %v64
    %266 = vmatprep.subr.mxu0 %v61
    %267 = vmatpush1.msra.mxu0 %v60
    %268 = vmatprep.subr.mxu0 %v57
    %269 = vmatpush1.msra.mxu0 %v56
    %270 = vmatprep.subr.mxu0 %v53
    %271 = vmatpush1.msra.mxu0 %v52
    %272 = vmatprep.subr.mxu0 %v49
    %273 = vmatpush1.msra.mxu0 %v48
    %274 = vmatprep.subr.mxu0 %v45
    %275 = vmatpush1.msra.mxu0 %v44
    %276 = vmatprep.subr.mxu0 %v41
    %277 = vmatpush1.msra.mxu0 %v40
    %278 = vmatprep.subr.mxu0 %v37
    %279 = vmatpush1.msra.mxu0 %v36
    %280 = vmatprep.subr.mxu0 %v33
    %281 = vmatpush1.msra.mxu0 %v32
    %282 = vmatprep.subr.mxu0 %v157
    %283 = vmatpush2.msra.mxu0 %v156
    %284 = vmatprep.subr.mxu0 %v153
    %285 = vmatpush2.msra.mxu0 %v152
    %286 = vmatprep.subr.mxu0 %v149
    %287 = vmatpush2.msra.mxu0 %v148
    %288 = vmatprep.subr.mxu0 %v145
    %289 = vmatpush2.msra.mxu0 %v144
    %290 = vmatprep.subr.mxu0 %v141
    %291 = vmatpush2.msra.mxu0 %v140
    %292 = vmatprep.subr.mxu0 %v137
    %293 = vmatpush2.msra.mxu0 %v136
    %294 = vmatprep.subr.mxu0 %v133
    %295 = vmatpush2.msra.mxu0 %v132
    %296 = vmatprep.subr.mxu0 %v129
    %297 = vmatpush2.msra.mxu0 %v128
    %298 = vmatprep.subr.mxu0 %v125
    %299 = vmatpush2.msra.mxu0 %v124
    %300 = vmatprep.subr.mxu0 %v121
    %301 = vmatpush2.msra.mxu0 %v120
    %302 = vmatprep.subr.mxu0 %v117
    %303 = vmatpush2.msra.mxu0 %v116
    %304 = vmatprep.subr.mxu0 %v113
    %305 = vmatpush2.msra.mxu0 %v112
    %306 = vmatprep.subr.mxu0 %v109
    %307 = vmatpush2.msra.mxu0 %v108
    %308 = vmatprep.subr.mxu0 %v105
    %309 = vmatpush2.msra.mxu0 %v104
    %310 = vmatprep.subr.mxu0 %v101
    %311 = vmatpush2.msra.mxu0 %v100
    %312 = vmatprep.subr.mxu0 %v97
    %313 = vmatpush2.msra.mxu0 %v96
    %314 = vmatprep.mubr.f32.mxu0 %v27
    %315 = vmatmul.mubr.f32.gmra.mxu0 %v26
    %v316 = vpop.f32.mrf.mxu0
    %v317 = vadd.f32 %v213, %v316
    %v318 = vpop.f32.mrf.mxu0
    %v319 = vadd.f32 %v217, %v318
    %320 = vmatprep.mubr.f32.mxu0 %v30
    %321 = vmatmul.mubr.f32.gmra.mxu0 %v29
    %v322 = vpop.f32.mrf.mxu0
    %v323 = vadd.f32 %v213, %v322
    %v324 = vpop.f32.mrf.mxu0
    %v325 = vadd.f32 %v217, %v324
    %326 = vdwg.mxu0
    %327 = vmatprep.subr.mxu0 0.0
    %328 = vmatpush1.msra.mxu0 0.0
    %329 = vmatprep.subr.mxu0 0.0
    %330 = vmatpush1.msra.mxu0 0.0
    %331 = vmatprep.subr.mxu0 0.0
    %332 = vmatpush1.msra.mxu0 0.0
    %333 = vmatprep.subr.mxu0 0.0
    %334 = vmatpush1.msra.mxu0 0.0
    %335 = vmatprep.subr.mxu0 %v242
    %336 = vmatpush1.msra.mxu0 %v239
    %337 = vmatprep.subr.mxu0 %v201
    %338 = vmatpush1.msra.mxu0 %v200
    %339 = vmatprep.subr.mxu0 %v197
    %340 = vmatpush1.msra.mxu0 %v196
    %341 = vmatprep.subr.mxu0 %v193
    %342 = vmatpush1.msra.mxu0 %v192
    %343 = vmatprep.subr.mxu0 %v189
    %344 = vmatpush1.msra.mxu0 %v188
    %345 = vmatprep.subr.mxu0 %v185
    %346 = vmatpush1.msra.mxu0 %v184
    %347 = vmatprep.subr.mxu0 %v181
    %348 = vmatpush1.msra.mxu0 %v180
    %349 = vmatprep.subr.mxu0 %v177
    %350 = vmatpush1.msra.mxu0 %v176
    %351 = vmatprep.subr.mxu0 %v173
    %352 = vmatpush1.msra.mxu0 %v172
    %353 = vmatprep.subr.mxu0 %v169
    %354 = vmatpush1.msra.mxu0 %v168
    %355 = vmatprep.subr.mxu0 %v165
    %356 = vmatpush1.msra.mxu0 %v164
    %357 = vmatprep.subr.mxu0 %v161
    %358 = vmatpush1.msra.mxu0 %v160
    %359 = vmatprep.subr.mxu0 0.0
    %360 = vmatpush2.msra.mxu0 0.0
    %361 = vmatprep.subr.mxu0 0.0
    %362 = vmatpush2.msra.mxu0 0.0
    %363 = vmatprep.subr.mxu0 0.0
    %364 = vmatpush2.msra.mxu0 0.0
    %365 = vmatprep.subr.mxu0 0.0
    %366 = vmatpush2.msra.mxu0 0.0
    %367 = vmatprep.subr.mxu0 0.0
    %368 = vmatpush2.msra.mxu0 0.0
    %369 = vmatprep.subr.mxu0 0.0
    %370 = vmatpush2.msra.mxu0 0.0
    %371 = vmatprep.subr.mxu0 0.0
    %372 = vmatpush2.msra.mxu0 0.0
    %373 = vmatprep.subr.mxu0 0.0
    %374 = vmatpush2.msra.mxu0 0.0
    %375 = vmatprep.subr.mxu0 0.0
    %376 = vmatpush2.msra.mxu0 0.0
    %377 = vmatprep.subr.mxu0 0.0
    %378 = vmatpush2.msra.mxu0 0.0
    %379 = vmatprep.subr.mxu0 0.0
    %380 = vmatpush2.msra.mxu0 0.0
    %381 = vmatprep.subr.mxu0 0.0
    %382 = vmatpush2.msra.mxu0 0.0
    %383 = vmatprep.subr.mxu0 0.0
    %384 = vmatpush2.msra.mxu0 0.0
    %385 = vmatprep.subr.mxu0 0.0
    %386 = vmatpush2.msra.mxu0 0.0
    %387 = vmatprep.subr.mxu0 0.0
    %388 = vmatpush2.msra.mxu0 0.0
    %389 = vmatprep.subr.mxu0 0.0
    %390 = vmatpush2.msra.mxu0 0.0
    %391 = vmatprep.mubr.f32.mxu0 0.0
    %392 = vmatmul.mubr.f32.gmra.mxu0 %v232
    %v393 = vpop.f32.mrf.mxu0
    %v394 = vadd.f32 %v317, %v393
    %v395 = vpop.f32.mrf.mxu0
    %v396 = vadd.f32 %v319, %v395
    %397 = vmatprep.mubr.f32.mxu0 0.0
    %398 = vmatmul.mubr.f32.gmra.mxu0 %v235
    %v399 = vpop.f32.mrf.mxu0
    %v400 = vadd.f32 %v323, %v399
    %v401 = vpop.f32.mrf.mxu0
    %v402 = vadd.f32 %v325, %v401
    %403 = vdwg.mxu0
    %404 = vmatprep.subr.mxu0 %v95
    %405 = vmatpush1.msra.mxu0 %v94
    %406 = vmatprep.subr.mxu0 %v91
    %407 = vmatpush1.msra.mxu0 %v90
    %408 = vmatprep.subr.mxu0 %v87
    %409 = vmatpush1.msra.mxu0 %v86
    %410 = vmatprep.subr.mxu0 %v83
    %411 = vmatpush1.msra.mxu0 %v82
    %412 = vmatprep.subr.mxu0 %v79
    %413 = vmatpush1.msra.mxu0 %v78
    %414 = vmatprep.subr.mxu0 %v75
    %415 = vmatpush1.msra.mxu0 %v74
    %416 = vmatprep.subr.mxu0 %v71
    %417 = vmatpush1.msra.mxu0 %v70
    %418 = vmatprep.subr.mxu0 %v67
    %419 = vmatpush1.msra.mxu0 %v66
    %420 = vmatprep.subr.mxu0 %v63
    %421 = vmatpush1.msra.mxu0 %v62
    %422 = vmatprep.subr.mxu0 %v59
    %423 = vmatpush1.msra.mxu0 %v58
    %424 = vmatprep.subr.mxu0 %v55
    %425 = vmatpush1.msra.mxu0 %v54
    %426 = vmatprep.subr.mxu0 %v51
    %427 = vmatpush1.msra.mxu0 %v50
    %428 = vmatprep.subr.mxu0 %v47
    %429 = vmatpush1.msra.mxu0 %v46
    %430 = vmatprep.subr.mxu0 %v43
    %431 = vmatpush1.msra.mxu0 %v42
    %432 = vmatprep.subr.mxu0 %v39
    %433 = vmatpush1.msra.mxu0 %v38
    %434 = vmatprep.subr.mxu0 %v35
    %435 = vmatpush1.msra.mxu0 %v34
    %436 = vmatprep.subr.mxu0 %v159
    %437 = vmatpush2.msra.mxu0 %v158
    %438 = vmatprep.subr.mxu0 %v155
    %439 = vmatpush2.msra.mxu0 %v154
    %440 = vmatprep.subr.mxu0 %v151
    %441 = vmatpush2.msra.mxu0 %v150
    %442 = vmatprep.subr.mxu0 %v147
    %443 = vmatpush2.msra.mxu0 %v146
    %444 = vmatprep.subr.mxu0 %v143
    %445 = vmatpush2.msra.mxu0 %v142
    %446 = vmatprep.subr.mxu0 %v139
    %447 = vmatpush2.msra.mxu0 %v138
    %448 = vmatprep.subr.mxu0 %v135
    %449 = vmatpush2.msra.mxu0 %v134
    %450 = vmatprep.subr.mxu0 %v131
    %451 = vmatpush2.msra.mxu0 %v130
    %452 = vmatprep.subr.mxu0 %v127
    %453 = vmatpush2.msra.mxu0 %v126
    %454 = vmatprep.subr.mxu0 %v123
    %455 = vmatpush2.msra.mxu0 %v122
    %456 = vmatprep.subr.mxu0 %v119
    %457 = vmatpush2.msra.mxu0 %v118
    %458 = vmatprep.subr.mxu0 %v115
    %459 = vmatpush2.msra.mxu0 %v114
    %460 = vmatprep.subr.mxu0 %v111
    %461 = vmatpush2.msra.mxu0 %v110
    %462 = vmatprep.subr.mxu0 %v107
    %463 = vmatpush2.msra.mxu0 %v106
    %464 = vmatprep.subr.mxu0 %v103
    %465 = vmatpush2.msra.mxu0 %v102
    %466 = vmatprep.subr.mxu0 %v99
    %467 = vmatpush2.msra.mxu0 %v98
    %468 = vmatprep.mubr.f32.mxu0 %v27
    %469 = vmatmul.mubr.f32.gmra.mxu0 %v26
    %v470 = vpop.f32.mrf.mxu0
    %v471 = vadd.f32 %v221, %v470
    %v472 = vpop.f32.mrf.mxu0
    %v473 = vadd.f32 %v225, %v472
    %474 = vmatprep.mubr.f32.mxu0 %v30
    %475 = vmatmul.mubr.f32.gmra.mxu0 %v29
    %v476 = vpop.f32.mrf.mxu0
    %v477 = vadd.f32 %v221, %v476
    %v478 = vpop.f32.mrf.mxu0
    %v479 = vadd.f32 %v225, %v478
    %480 = vdwg.mxu0
    %481 = vmatprep.subr.mxu0 0.0
    %482 = vmatpush1.msra.mxu0 0.0
    %483 = vmatprep.subr.mxu0 0.0
    %484 = vmatpush1.msra.mxu0 0.0
    %485 = vmatprep.subr.mxu0 0.0
    %486 = vmatpush1.msra.mxu0 0.0
    %487 = vmatprep.subr.mxu0 0.0
    %488 = vmatpush1.msra.mxu0 0.0
    %489 = vmatprep.subr.mxu0 %v248
    %490 = vmatpush1.msra.mxu0 %v245
    %491 = vmatprep.subr.mxu0 %v203
    %492 = vmatpush1.msra.mxu0 %v202
    %493 = vmatprep.subr.mxu0 %v199
    %494 = vmatpush1.msra.mxu0 %v198
    %495 = vmatprep.subr.mxu0 %v195
    %496 = vmatpush1.msra.mxu0 %v194
    %497 = vmatprep.subr.mxu0 %v191
    %498 = vmatpush1.msra.mxu0 %v190
    %499 = vmatprep.subr.mxu0 %v187
    %500 = vmatpush1.msra.mxu0 %v186
    %501 = vmatprep.subr.mxu0 %v183
    %502 = vmatpush1.msra.mxu0 %v182
    %503 = vmatprep.subr.mxu0 %v179
    %504 = vmatpush1.msra.mxu0 %v178
    %505 = vmatprep.subr.mxu0 %v175
    %506 = vmatpush1.msra.mxu0 %v174
    %507 = vmatprep.subr.mxu0 %v171
    %508 = vmatpush1.msra.mxu0 %v170
    %509 = vmatprep.subr.mxu0 %v167
    %510 = vmatpush1.msra.mxu0 %v166
    %511 = vmatprep.subr.mxu0 %v163
    %512 = vmatpush1.msra.mxu0 %v162
    %513 = vmatprep.subr.mxu0 0.0
    %514 = vmatpush2.msra.mxu0 0.0
    %515 = vmatprep.subr.mxu0 0.0
    %516 = vmatpush2.msra.mxu0 0.0
    %517 = vmatprep.subr.mxu0 0.0
    %518 = vmatpush2.msra.mxu0 0.0
    %519 = vmatprep.subr.mxu0 0.0
    %520 = vmatpush2.msra.mxu0 0.0
    %521 = vmatprep.subr.mxu0 0.0
    %522 = vmatpush2.msra.mxu0 0.0
    %523 = vmatprep.subr.mxu0 0.0
    %524 = vmatpush2.msra.mxu0 0.0
    %525 = vmatprep.subr.mxu0 0.0
    %526 = vmatpush2.msra.mxu0 0.0
    %527 = vmatprep.subr.mxu0 0.0
    %528 = vmatpush2.msra.mxu0 0.0
    %529 = vmatprep.subr.mxu0 0.0
    %530 = vmatpush2.msra.mxu0 0.0
    %531 = vmatprep.subr.mxu0 0.0
    %532 = vmatpush2.msra.mxu0 0.0
    %533 = vmatprep.subr.mxu0 0.0
    %534 = vmatpush2.msra.mxu0 0.0
    %535 = vmatprep.subr.mxu0 0.0
    %536 = vmatpush2.msra.mxu0 0.0
    %537 = vmatprep.subr.mxu0 0.0
    %538 = vmatpush2.msra.mxu0 0.0
    %539 = vmatprep.subr.mxu0 0.0
    %540 = vmatpush2.msra.mxu0 0.0
    %541 = vmatprep.subr.mxu0 0.0
    %542 = vmatpush2.msra.mxu0 0.0
    %543 = vmatprep.subr.mxu0 0.0
    %544 = vmatpush2.msra.mxu0 0.0
    %545 = vmatprep.mubr.f32.mxu0 0.0
    %546 = vmatmul.mubr.f32.gmra.mxu0 %v232
    %v547 = vpop.f32.mrf.mxu0
    %v548 = vadd.f32 %v471, %v547
    %v549 = vpop.f32.mrf.mxu0
    %v550 = vadd.f32 %v473, %v549
    %551 = vmatprep.mubr.f32.mxu0 0.0
    %552 = vmatmul.mubr.f32.gmra.mxu0 %v235
    %v553 = vpop.f32.mrf.mxu0
    %v554 = vadd.f32 %v477, %v553
    %v555 = vpop.f32.mrf.mxu0
    %v556 = vadd.f32 %v479, %v555
    %557 = vdwg.mxu0
    %v558 = vmax.f32 %v394, 0.0
    %v559 = vmax.f32 %v396, 0.0
    %v560 = vmax.f32 %v548, 0.0
    %v561 = vmax.f32 %v550, 0.0
    %v562 = vmax.f32 %v400, 0.0
    %v563 = vmax.f32 %v402, 0.0
    %v564 = vmax.f32 %v554, 0.0
    %v565 = vmax.f32 %v556, 0.0
    %v566 = vld [vmem:[%s4] sm:$0xff]
    %v567 = vld [vmem:[%s4 + $0x8] sm:$0xff]
    %v568 = vld [vmem:[%s4 + $0x10] sm:$0xff]
    %v569 = vld [vmem:[%s4 + $0x18] sm:$0xff]
    %v570 = vld [vmem:[%s4 + $0x20] sm:$0xff]
    %v571 = vld [vmem:[%s4 + $0x28] sm:$0xff]
    %v572 = vld [vmem:[%s4 + $0x30] sm:$0xff]
    %v573 = vld [vmem:[%s4 + $0x38] sm:$0xff]
    %v574 = vld [vmem:[%s4 + $0x40] sm:$0xff]
    %v575 = vld [vmem:[%s4 + $0x48] sm:$0xff]
    %v576 = vld [vmem:[%s4 + $0x50] sm:$0xff]
    %v577 = vld [vmem:[%s4 + $0x58] sm:$0xff]
    %v578 = vld [vmem:[%s4 + $0x60] sm:$0xff]
    %v579 = vld [vmem:[%s4 + $0x68] sm:$0xff]
    %v580 = vld [vmem:[%s4 + $0x70] sm:$0xff]
    %v581 = vld [vmem:[%s4 + $0x78] sm:$0xff]
    %v582 = vld [vmem:[%s4 + $0x80] sm:$0xff]
    %v583 = vld [vmem:[%s4 + $0x88] sm:$0xff]
    %v584 = vld [vmem:[%s4 + $0x90] sm:$0xff]
    %v585 = vld [vmem:[%s4 + $0x98] sm:$0xff]
    %v586 = vld [vmem:[%s4 + $0xa0] sm:$0xff]
    %v587 = vld [vmem:[%s4 + $0xa8] sm:$0xff]
    %v588 = vld [vmem:[%s4 + $0xb0] sm:$0xff]
    %v589 = vld [vmem:[%s4 + $0xb8] sm:$0xff]
    %v590 = vld [vmem:[%s4 + $0xc0] sm:$0xff]
    %v591 = vld [vmem:[%s4 + $0xc8] sm:$0xff]
    %v592 = vld [vmem:[%s4 + $0xd0] sm:$0xff]
    %v593 = vld [vmem:[%s4 + $0xd8] sm:$0xff]
    %v594 = vld [vmem:[%s4 + $0xe0] sm:$0xff]
    %v595 = vld [vmem:[%s4 + $0xe8] sm:$0xff]
    %v596 = vld [vmem:[%s4 + $0xf0] sm:$0xff]
    %v597 = vld [vmem:[%s4 + $0xf8] sm:$0xff]
    %v598 = vld [vmem:[%s4 + $0x100] sm:$0xff]
    %v599 = vld [vmem:[%s4 + $0x108] sm:$0xff]
    %v600 = vld [vmem:[%s4 + $0x110] sm:$0xff]
    %v601 = vld [vmem:[%s4 + $0x118] sm:$0xff]
    %v602 = vld [vmem:[%s4 + $0x120] sm:$0xff]
    %v603 = vld [vmem:[%s4 + $0x128] sm:$0xff]
    %v604 = vld [vmem:[%s4 + $0x130] sm:$0xff]
    %v605 = vld [vmem:[%s4 + $0x138] sm:$0xff]
    %v606 = vld [vmem:[%s4 + $0x140] sm:$0xff]
    %v607 = vld [vmem:[%s4 + $0x148] sm:$0xff]
    %v608 = vld [vmem:[%s4 + $0x150] sm:$0xff]
    %v609 = vld [vmem:[%s4 + $0x158] sm:$0xff]
    %v610 = vld [vmem:[%s4 + $0x160] sm:$0xff]
    %v611 = vld [vmem:[%s4 + $0x168] sm:$0xff]
    %v612 = vld [vmem:[%s4 + $0x170] sm:$0xff]
    %v613 = vld [vmem:[%s4 + $0x178] sm:$0xff]
    %v614 = vld [vmem:[%s4 + $0x180] sm:$0xff]
    %v615 = vld [vmem:[%s4 + $0x188] sm:$0xff]
    %v616 = vld [vmem:[%s4 + $0x190] sm:$0xff]
    %v617 = vld [vmem:[%s4 + $0x198] sm:$0xff]
    %v618 = vld [vmem:[%s4 + $0x1a0] sm:$0xff]
    %v619 = vld [vmem:[%s4 + $0x1a8] sm:$0xff]
    %v620 = vld [vmem:[%s4 + $0x1b0] sm:$0xff]
    %v621 = vld [vmem:[%s4 + $0x1b8] sm:$0xff]
    %v622 = vld [vmem:[%s4 + $0x1c0] sm:$0xff]
    %v623 = vld [vmem:[%s4 + $0x1c8] sm:$0xff]
    %v624 = vld [vmem:[%s4 + $0x1d0] sm:$0xff]
    %v625 = vld [vmem:[%s4 + $0x1d8] sm:$0xff]
    %v626 = vld [vmem:[%s4 + $0x1e0] sm:$0xff]
    %v627 = vld [vmem:[%s4 + $0x1e8] sm:$0xff]
    %v628 = vld [vmem:[%s4 + $0x1f0] sm:$0xff]
    %v629 = vld [vmem:[%s4 + $0x1f8] sm:$0xff]
    %v630 = vld [vmem:[%s4 + $0x200] sm:$0xff]
    %v631 = vld [vmem:[%s4 + $0x208] sm:$0xff]
    %v632 = vld [vmem:[%s4 + $0x210] sm:$0xff]
    %v633 = vld [vmem:[%s4 + $0x218] sm:$0xff]
    %v634 = vld [vmem:[%s4 + $0x220] sm:$0xff]
    %v635 = vld [vmem:[%s4 + $0x228] sm:$0xff]
    %v636 = vld [vmem:[%s4 + $0x230] sm:$0xff]
    %v637 = vld [vmem:[%s4 + $0x238] sm:$0xff]
    %v638 = vld [vmem:[%s4 + $0x240] sm:$0xff]
    %v639 = vld [vmem:[%s4 + $0x248] sm:$0xff]
    %v640 = vld [vmem:[%s4 + $0x250] sm:$0xff]
    %v641 = vld [vmem:[%s4 + $0x258] sm:$0xff]
    %v642 = vld [vmem:[%s4 + $0x260] sm:$0xff]
    %v643 = vld [vmem:[%s4 + $0x268] sm:$0xff]
    %v644 = vld [vmem:[%s4 + $0x270] sm:$0xff]
    %v645 = vld [vmem:[%s4 + $0x278] sm:$0xff]
    %v646 = vld [vmem:[%s4 + $0x280] sm:$0xff]
    %v647 = vld [vmem:[%s4 + $0x288] sm:$0xff]
    %v648 = vld [vmem:[%s4 + $0x290] sm:$0xff]
    %v649 = vld [vmem:[%s4 + $0x298] sm:$0xff]
    %v650 = vld [vmem:[%s4 + $0x2a0] sm:$0xff]
    %v651 = vld [vmem:[%s4 + $0x2a8] sm:$0xff]
    %v652 = vld [vmem:[%s4 + $0x2b0] sm:$0xff]
    %v653 = vld [vmem:[%s4 + $0x2b8] sm:$0xff]
    %v654 = vld [vmem:[%s4 + $0x2c0] sm:$0xff]
    %v655 = vld [vmem:[%s4 + $0x2c8] sm:$0xff]
    %v656 = vld [vmem:[%s4 + $0x2d0] sm:$0xff]
    %v657 = vld [vmem:[%s4 + $0x2d8] sm:$0xff]
    %v658 = vld [vmem:[%s4 + $0x2e0] sm:$0xff]
    %v659 = vld [vmem:[%s4 + $0x2e8] sm:$0xff]
    %v660 = vld [vmem:[%s4 + $0x2f0] sm:$0xff]
    %v661 = vld [vmem:[%s4 + $0x2f8] sm:$0xff]
    %v662 = vld [vmem:[%s4 + $0x300] sm:$0xff]
    %v663 = vld [vmem:[%s4 + $0x308] sm:$0xff]
    %v664 = vld [vmem:[%s4 + $0x310] sm:$0xff]
    %v665 = vld [vmem:[%s4 + $0x318] sm:$0xff]
    %v666 = vld [vmem:[%s4 + $0x320] sm:$0xff]
    %v667 = vld [vmem:[%s4 + $0x328] sm:$0xff]
    %v668 = vld [vmem:[%s4 + $0x330] sm:$0xff]
    %v669 = vld [vmem:[%s4 + $0x338] sm:$0xff]
    %v670 = vld [vmem:[%s4 + $0x340] sm:$0xff]
    %v671 = vld [vmem:[%s4 + $0x348] sm:$0xff]
    %v672 = vld [vmem:[%s4 + $0x350] sm:$0xff]
    %v673 = vld [vmem:[%s4 + $0x358] sm:$0xff]
    %v674 = vld [vmem:[%s4 + $0x360] sm:$0xff]
    %v675 = vld [vmem:[%s4 + $0x368] sm:$0xff]
    %v676 = vld [vmem:[%s4 + $0x370] sm:$0xff]
    %v677 = vld [vmem:[%s4 + $0x378] sm:$0xff]
    %v678 = vld [vmem:[%s4 + $0x380] sm:$0xff]
    %v679 = vld [vmem:[%s4 + $0x388] sm:$0xff]
    %v680 = vld [vmem:[%s4 + $0x390] sm:$0xff]
    %v681 = vld [vmem:[%s4 + $0x398] sm:$0xff]
    %v682 = vld [vmem:[%s4 + $0x3a0] sm:$0xff]
    %v683 = vld [vmem:[%s4 + $0x3a8] sm:$0xff]
    %v684 = vld [vmem:[%s4 + $0x3b0] sm:$0xff]
    %v685 = vld [vmem:[%s4 + $0x3b8] sm:$0xff]
    %v686 = vld [vmem:[%s4 + $0x3c0] sm:$0xff]
    %v687 = vld [vmem:[%s4 + $0x3c8] sm:$0xff]
    %v688 = vld [vmem:[%s4 + $0x3d0] sm:$0xff]
    %v689 = vld [vmem:[%s4 + $0x3d8] sm:$0xff]
    %v690 = vld [vmem:[%s4 + $0x3e0] sm:$0xff]
    %v691 = vld [vmem:[%s4 + $0x3e8] sm:$0xff]
    %v692 = vld [vmem:[%s4 + $0x3f0] sm:$0xff]
    %v693 = vld [vmem:[%s4 + $0x3f8] sm:$0xff]
    %v694 = vld [vmem:[%s4 + $0x400] sm:$0xff]
    %v695 = vld [vmem:[%s4 + $0x408] sm:$0xff]
    %v696 = vld [vmem:[%s4 + $0x410] sm:$0xff]
    %v697 = vld [vmem:[%s4 + $0x418] sm:$0xff]
    %v698 = vld [vmem:[%s4 + $0x420] sm:$0xff]
    %v699 = vld [vmem:[%s4 + $0x428] sm:$0xff]
    %v700 = vld [vmem:[%s4 + $0x430] sm:$0xff]
    %v701 = vld [vmem:[%s4 + $0x438] sm:$0xff]
    %v702 = vld [vmem:[%s4 + $0x440] sm:$0xff]
    %v703 = vld [vmem:[%s4 + $0x448] sm:$0xff]
    %v704 = vld [vmem:[%s4 + $0x450] sm:$0xff]
    %v705 = vld [vmem:[%s4 + $0x458] sm:$0xff]
    %v706 = vld [vmem:[%s4 + $0x460] sm:$0xff]
    %v707 = vld [vmem:[%s4 + $0x468] sm:$0xff]
    %v708 = vld [vmem:[%s4 + $0x470] sm:$0xff]
    %v709 = vld [vmem:[%s4 + $0x478] sm:$0xff]
    %v710 = vld [vmem:[%s4 + $0x480] sm:$0xff]
    %v711 = vld [vmem:[%s4 + $0x488] sm:$0xff]
    %v712 = vld [vmem:[%s4 + $0x490] sm:$0xff]
    %v713 = vld [vmem:[%s4 + $0x498] sm:$0xff]
    %v714 = vld [vmem:[%s4 + $0x4a0] sm:$0xff]
    %v715 = vld [vmem:[%s4 + $0x4a8] sm:$0xff]
    %v716 = vld [vmem:[%s4 + $0x4b0] sm:$0xff]
    %v717 = vld [vmem:[%s4 + $0x4b8] sm:$0xff]
    %v718 = vld [vmem:[%s4 + $0x4c0] sm:$0xff]
    %v719 = vld [vmem:[%s4 + $0x4c8] sm:$0xff]
    %v720 = vld [vmem:[%s4 + $0x4d0] sm:$0xff]
    %v721 = vld [vmem:[%s4 + $0x4d8] sm:$0xff]
    %v722 = vld [vmem:[%s4 + $0x4e0] sm:$0xff]
    %v723 = vld [vmem:[%s4 + $0x4e8] sm:$0xff]
    %v724 = vld [vmem:[%s4 + $0x4f0] sm:$0xff]
    %v725 = vld [vmem:[%s4 + $0x4f8] sm:$0xff]
    %v726 = vld [vmem:[%s4 + $0x500] sm:$0xff]
    %v727 = vld [vmem:[%s4 + $0x508] sm:$0xff]
    %v728 = vld [vmem:[%s4 + $0x510] sm:$0xff]
    %v729 = vld [vmem:[%s4 + $0x518] sm:$0xff]
    %v730 = vld [vmem:[%s4 + $0x520] sm:$0xff]
    %v731 = vld [vmem:[%s4 + $0x528] sm:$0xff]
    %v732 = vld [vmem:[%s4 + $0x530] sm:$0xff]
    %v733 = vld [vmem:[%s4 + $0x538] sm:$0xff]
    %v734 = vld [vmem:[%s4 + $0x540] sm:$0xff]
    %v735 = vld [vmem:[%s4 + $0x548] sm:$0xff]
    %v736 = vld [vmem:[%s4 + $0x550] sm:$0xff]
    %v737 = vld [vmem:[%s4 + $0x558] sm:$0xff]
    %v738 = vld [vmem:[%s4 + $0x560] sm:$0xff]
    %v739 = vld [vmem:[%s4 + $0x568] sm:$0xff]
    %v740 = vld [vmem:[%s4 + $0x570] sm:$0xff]
    %v741 = vld [vmem:[%s4 + $0x578] sm:$0xff]
    %v742 = vld [vmem:[%s4 + $0x580] sm:$0xff]
    %v743 = vld [vmem:[%s4 + $0x588] sm:$0xff]
    %v744 = vld [vmem:[%s4 + $0x590] sm:$0xff]
    %v745 = vld [vmem:[%s4 + $0x598] sm:$0xff]
    %v746 = vld [vmem:[%s4 + $0x5a0] sm:$0xff]
    %v747 = vld [vmem:[%s4 + $0x5a8] sm:$0xff]
    %v748 = vld [vmem:[%s4 + $0x5b0] sm:$0xff]
    %v749 = vld [vmem:[%s4 + $0x5b8] sm:$0xff]
    %v750 = vld [vmem:[%s4 + $0x5c0] sm:$0xff]
    %v751 = vld [vmem:[%s4 + $0x5c8] sm:$0xff]
    %v752 = vld [vmem:[%s4 + $0x5d0] sm:$0xff]
    %v753 = vld [vmem:[%s4 + $0x5d8] sm:$0xff]
    %v754 = vld [vmem:[%s4 + $0x5e0] sm:$0xff]
    %v755 = vld [vmem:[%s4 + $0x5e8] sm:$0xff]
    %v756 = vld [vmem:[%s4 + $0x5f0] sm:$0xff]
    %v757 = vld [vmem:[%s4 + $0x5f8] sm:$0xff]
    %v758 = vld [vmem:[%s4 + $0x600] sm:$0xff]
    %v759 = vld [vmem:[%s4 + $0x608] sm:$0xff]
    %v760 = vld [vmem:[%s4 + $0x610] sm:$0xff]
    %v761 = vld [vmem:[%s4 + $0x618] sm:$0xff]
    %v762 = vld [vmem:[%s4 + $0x620] sm:$0xff]
    %v763 = vld [vmem:[%s4 + $0x628] sm:$0xff]
    %v764 = vld [vmem:[%s4 + $0x630] sm:$0xff]
    %v765 = vld [vmem:[%s4 + $0x638] sm:$0xff]
    %v766 = vld [vmem:[%s4 + $0x640] sm:$0xff]
    %v767 = vld [vmem:[%s4 + $0x648] sm:$0xff]
    %v768 = vld [vmem:[%s4 + $0x650] sm:$0xff]
    %v769 = vld [vmem:[%s4 + $0x658] sm:$0xff]
    %v770 = vld [vmem:[%s4 + $0x660] sm:$0xff]
    %v771 = vld [vmem:[%s4 + $0x668] sm:$0xff]
    %v772 = vld [vmem:[%s4 + $0x670] sm:$0xff]
    %v773 = vld [vmem:[%s4 + $0x678] sm:$0xff]
    %v774 = vld [vmem:[%s4 + $0x680] sm:$0xff]
    %v775 = vld [vmem:[%s4 + $0x688] sm:$0xff]
    %v776 = vld [vmem:[%s4 + $0x690] sm:$0xff]
    %v777 = vld [vmem:[%s4 + $0x698] sm:$0xff]
    %v778 = vld [vmem:[%s4 + $0x6a0] sm:$0xff]
    %v779 = vld [vmem:[%s4 + $0x6a8] sm:$0xff]
    %v780 = vld [vmem:[%s4 + $0x6b0] sm:$0xff]
    %v781 = vld [vmem:[%s4 + $0x6b8] sm:$0xff]
    %v782 = vld [vmem:[%s4 + $0x6c0] sm:$0xff]
    %v783 = vld [vmem:[%s4 + $0x6c8] sm:$0xff]
    %v784 = vld [vmem:[%s4 + $0x6d0] sm:$0xff]
    %v785 = vld [vmem:[%s4 + $0x6d8] sm:$0xff]
    %v786 = vld [vmem:[%s4 + $0x6e0] sm:$0xff]
    %v787 = vld [vmem:[%s4 + $0x6e8] sm:$0xff]
    %v788 = vld [vmem:[%s4 + $0x6f0] sm:$0xff]
    %v789 = vld [vmem:[%s4 + $0x6f8] sm:$0xff]
    %v790 = vld [vmem:[%s5] sm:$0xf]
    %v792 = vlaneseq
    %v793 = vshrl.u32 %v792, 7
    %v794 = vsub.s32 0, %v793
    %v795 = vrot.slane %v790, %v794
    %v796 = vlaneseq
    %v797 = vshrl.u32 %v796, 7
    %v798 = vsub.s32 1, %v797
    %v799 = vrot.slane %v790, %v798
    %v800 = vlaneseq
    %v801 = vshrl.u32 %v800, 7
    %v802 = vsub.s32 2, %v801
    %v803 = vrot.slane %v790, %v802
    %v804 = vlaneseq
    %v805 = vshrl.u32 %v804, 7
    %v806 = vsub.s32 3, %v805
    %v807 = vrot.slane %v790, %v806
    %vm812 = vcmask 523264
    %v814 = vsel %vm812, %v561, 0
    %v817 = vsel %vm812, %v565, 0
    %819 = vmatprep.subr.mxu0 %v627
    %820 = vmatpush1.msra.mxu0 %v626
    %821 = vmatprep.subr.mxu0 %v623
    %822 = vmatpush1.msra.mxu0 %v622
    %823 = vmatprep.subr.mxu0 %v619
    %824 = vmatpush1.msra.mxu0 %v618
    %825 = vmatprep.subr.mxu0 %v615
    %826 = vmatpush1.msra.mxu0 %v614
    %827 = vmatprep.subr.mxu0 %v611
    %828 = vmatpush1.msra.mxu0 %v610
    %829 = vmatprep.subr.mxu0 %v607
    %830 = vmatpush1.msra.mxu0 %v606
    %831 = vmatprep.subr.mxu0 %v603
    %832 = vmatpush1.msra.mxu0 %v602
    %833 = vmatprep.subr.mxu0 %v599
    %834 = vmatpush1.msra.mxu0 %v598
    %835 = vmatprep.subr.mxu0 %v595
    %836 = vmatpush1.msra.mxu0 %v594
    %837 = vmatprep.subr.mxu0 %v591
    %838 = vmatpush1.msra.mxu0 %v590
    %839 = vmatprep.subr.mxu0 %v587
    %840 = vmatpush1.msra.mxu0 %v586
    %841 = vmatprep.subr.mxu0 %v583
    %842 = vmatpush1.msra.mxu0 %v582
    %843 = vmatprep.subr.mxu0 %v579
    %844 = vmatpush1.msra.mxu0 %v578
    %845 = vmatprep.subr.mxu0 %v575
    %846 = vmatpush1.msra.mxu0 %v574
    %847 = vmatprep.subr.mxu0 %v571
    %848 = vmatpush1.msra.mxu0 %v570
    %849 = vmatprep.subr.mxu0 %v567
    %850 = vmatpush1.msra.mxu0 %v566
    %851 = vmatprep.subr.mxu0 %v691
    %852 = vmatpush2.msra.mxu0 %v690
    %853 = vmatprep.subr.mxu0 %v687
    %854 = vmatpush2.msra.mxu0 %v686
    %855 = vmatprep.subr.mxu0 %v683
    %856 = vmatpush2.msra.mxu0 %v682
    %857 = vmatprep.subr.mxu0 %v679
    %858 = vmatpush2.msra.mxu0 %v678
    %859 = vmatprep.subr.mxu0 %v675
    %860 = vmatpush2.msra.mxu0 %v674
    %861 = vmatprep.subr.mxu0 %v671
    %862 = vmatpush2.msra.mxu0 %v670
    %863 = vmatprep.subr.mxu0 %v667
    %864 = vmatpush2.msra.mxu0 %v666
    %865 = vmatprep.subr.mxu0 %v663
    %866 = vmatpush2.msra.mxu0 %v662
    %867 = vmatprep.subr.mxu0 %v659
    %868 = vmatpush2.msra.mxu0 %v658
    %869 = vmatprep.subr.mxu0 %v655
    %870 = vmatpush2.msra.mxu0 %v654
    %871 = vmatprep.subr.mxu0 %v651
    %872 = vmatpush2.msra.mxu0 %v650
    %873 = vmatprep.subr.mxu0 %v647
    %874 = vmatpush2.msra.mxu0 %v646
    %875 = vmatprep.subr.mxu0 %v643
    %876 = vmatpush2.msra.mxu0 %v642
    %877 = vmatprep.subr.mxu0 %v639
    %878 = vmatpush2.msra.mxu0 %v638
    %879 = vmatprep.subr.mxu0 %v635
    %880 = vmatpush2.msra.mxu0 %v634
    %881 = vmatprep.subr.mxu0 %v631
    %882 = vmatpush2.msra.mxu0 %v630
    %883 = vmatprep.mubr.f32.mxu0 %v559
    %884 = vmatmul.mubr.f32.gmra.mxu0 %v558
    %v885 = vpop.f32.mrf.mxu0
    %v886 = vadd.f32 %v795, %v885
    %v887 = vpop.f32.mrf.mxu0
    %v888 = vadd.f32 %v799, %v887
    %889 = vmatprep.mubr.f32.mxu0 %v563
    %890 = vmatmul.mubr.f32.gmra.mxu0 %v562
    %v891 = vpop.f32.mrf.mxu0
    %v892 = vadd.f32 %v795, %v891
    %v893 = vpop.f32.mrf.mxu0
    %v894 = vadd.f32 %v799, %v893
    %895 = vdwg.mxu0
    %896 = vmatprep.subr.mxu0 %v755
    %897 = vmatpush1.msra.mxu0 %v754
    %898 = vmatprep.subr.mxu0 %v751
    %899 = vmatpush1.msra.mxu0 %v750
    %900 = vmatprep.subr.mxu0 %v747
    %901 = vmatpush1.msra.mxu0 %v746
    %902 = vmatprep.subr.mxu0 %v743
    %903 = vmatpush1.msra.mxu0 %v742
    %904 = vmatprep.subr.mxu0 %v739
    %905 = vmatpush1.msra.mxu0 %v738
    %906 = vmatprep.subr.mxu0 %v735
    %907 = vmatpush1.msra.mxu0 %v734
    %908 = vmatprep.subr.mxu0 %v731
    %909 = vmatpush1.msra.mxu0 %v730
    %910 = vmatprep.subr.mxu0 %v727
    %911 = vmatpush1.msra.mxu0 %v726
    %912 = vmatprep.subr.mxu0 %v723
    %913 = vmatpush1.msra.mxu0 %v722
    %914 = vmatprep.subr.mxu0 %v719
    %915 = vmatpush1.msra.mxu0 %v718
    %916 = vmatprep.subr.mxu0 %v715
    %917 = vmatpush1.msra.mxu0 %v714
    %918 = vmatprep.subr.mxu0 %v711
    %919 = vmatpush1.msra.mxu0 %v710
    %920 = vmatprep.subr.mxu0 %v707
    %921 = vmatpush1.msra.mxu0 %v706
    %922 = vmatprep.subr.mxu0 %v703
    %923 = vmatpush1.msra.mxu0 %v702
    %924 = vmatprep.subr.mxu0 %v699
    %925 = vmatpush1.msra.mxu0 %v698
    %926 = vmatprep.subr.mxu0 %v695
    %927 = vmatpush1.msra.mxu0 %v694
    %928 = vmatprep.subr.mxu0 0.0
    %929 = vmatpush2.msra.mxu0 0.0
    %930 = vmatprep.subr.mxu0 0.0
    %931 = vmatpush2.msra.mxu0 0.0
    %932 = vmatprep.subr.mxu0 0.0
    %933 = vmatpush2.msra.mxu0 0.0
    %934 = vmatprep.subr.mxu0 0.0
    %935 = vmatpush2.msra.mxu0 0.0
    %936 = vmatprep.subr.mxu0 0.0
    %937 = vmatpush2.msra.mxu0 0.0
    %938 = vmatprep.subr.mxu0 0.0
    %939 = vmatpush2.msra.mxu0 0.0
    %940 = vmatprep.subr.mxu0 0.0
    %941 = vmatpush2.msra.mxu0 0.0
    %942 = vmatprep.subr.mxu0 0.0
    %943 = vmatpush2.msra.mxu0 0.0
    %944 = vmatprep.subr.mxu0 %v787
    %945 = vmatpush2.msra.mxu0 %v786
    %946 = vmatprep.subr.mxu0 %v783
    %947 = vmatpush2.msra.mxu0 %v782
    %948 = vmatprep.subr.mxu0 %v779
    %949 = vmatpush2.msra.mxu0 %v778
    %950 = vmatprep.subr.mxu0 %v775
    %951 = vmatpush2.msra.mxu0 %v774
    %952 = vmatprep.subr.mxu0 %v771
    %953 = vmatpush2.msra.mxu0 %v770
    %954 = vmatprep.subr.mxu0 %v767
    %955 = vmatpush2.msra.mxu0 %v766
    %956 = vmatprep.subr.mxu0 %v763
    %957 = vmatpush2.msra.mxu0 %v762
    %958 = vmatprep.subr.mxu0 %v759
    %959 = vmatpush2.msra.mxu0 %v758
    %960 = vmatprep.mubr.f32.mxu0 %v814
    %961 = vmatmul.mubr.f32.gmra.mxu0 %v560
    %v962 = vpop.f32.mrf.mxu0
    %v963 = vadd.f32 %v886, %v962
    %v964 = vpop.f32.mrf.mxu0
    %v965 = vadd.f32 %v888, %v964
    %966 = vmatprep.mubr.f32.mxu0 %v817
    %967 = vmatmul.mubr.f32.gmra.mxu0 %v564
    %v968 = vpop.f32.mrf.mxu0
    %v969 = vadd.f32 %v892, %v968
    %v970 = vpop.f32.mrf.mxu0
    %v971 = vadd.f32 %v894, %v970
    %972 = vdwg.mxu0
    %973 = vmatprep.subr.mxu0 %v629
    %974 = vmatpush1.msra.mxu0 %v628
    %975 = vmatprep.subr.mxu0 %v625
    %976 = vmatpush1.msra.mxu0 %v624
    %977 = vmatprep.subr.mxu0 %v621
    %978 = vmatpush1.msra.mxu0 %v620
    %979 = vmatprep.subr.mxu0 %v617
    %980 = vmatpush1.msra.mxu0 %v616
    %981 = vmatprep.subr.mxu0 %v613
    %982 = vmatpush1.msra.mxu0 %v612
    %983 = vmatprep.subr.mxu0 %v609
    %984 = vmatpush1.msra.mxu0 %v608
    %985 = vmatprep.subr.mxu0 %v605
    %986 = vmatpush1.msra.mxu0 %v604
    %987 = vmatprep.subr.mxu0 %v601
    %988 = vmatpush1.msra.mxu0 %v600
    %989 = vmatprep.subr.mxu0 %v597
    %990 = vmatpush1.msra.mxu0 %v596
    %991 = vmatprep.subr.mxu0 %v593
    %992 = vmatpush1.msra.mxu0 %v592
    %993 = vmatprep.subr.mxu0 %v589
    %994 = vmatpush1.msra.mxu0 %v588
    %995 = vmatprep.subr.mxu0 %v585
    %996 = vmatpush1.msra.mxu0 %v584
    %997 = vmatprep.subr.mxu0 %v581
    %998 = vmatpush1.msra.mxu0 %v580
    %999 = vmatprep.subr.mxu0 %v577
    %1000 = vmatpush1.msra.mxu0 %v576
    %1001 = vmatprep.subr.mxu0 %v573
    %1002 = vmatpush1.msra.mxu0 %v572
    %1003 = vmatprep.subr.mxu0 %v569
    %1004 = vmatpush1.msra.mxu0 %v568
    %1005 = vmatprep.subr.mxu0 %v693
    %1006 = vmatpush2.msra.mxu0 %v692
    %1007 = vmatprep.subr.mxu0 %v689
    %1008 = vmatpush2.msra.mxu0 %v688
    %1009 = vmatprep.subr.mxu0 %v685
    %1010 = vmatpush2.msra.mxu0 %v684
    %1011 = vmatprep.subr.mxu0 %v681
    %1012 = vmatpush2.msra.mxu0 %v680
    %1013 = vmatprep.subr.mxu0 %v677
    %1014 = vmatpush2.msra.mxu0 %v676
    %1015 = vmatprep.subr.mxu0 %v673
    %1016 = vmatpush2.msra.mxu0 %v672
    %1017 = vmatprep.subr.mxu0 %v669
    %1018 = vmatpush2.msra.mxu0 %v668
    %1019 = vmatprep.subr.mxu0 %v665
    %1020 = vmatpush2.msra.mxu0 %v664
    %1021 = vmatprep.subr.mxu0 %v661
    %1022 = vmatpush2.msra.mxu0 %v660
    %1023 = vmatprep.subr.mxu0 %v657
    %1024 = vmatpush2.msra.mxu0 %v656
    %1025 = vmatprep.subr.mxu0 %v653
    %1026 = vmatpush2.msra.mxu0 %v652
    %1027 = vmatprep.subr.mxu0 %v649
    %1028 = vmatpush2.msra.mxu0 %v648
    %1029 = vmatprep.subr.mxu0 %v645
    %1030 = vmatpush2.msra.mxu0 %v644
    %1031 = vmatprep.subr.mxu0 %v641
    %1032 = vmatpush2.msra.mxu0 %v640
    %1033 = vmatprep.subr.mxu0 %v637
    %1034 = vmatpush2.msra.mxu0 %v636
    %1035 = vmatprep.subr.mxu0 %v633
    %1036 = vmatpush2.msra.mxu0 %v632
    %1037 = vmatprep.mubr.f32.mxu0 %v559
    %1038 = vmatmul.mubr.f32.gmra.mxu0 %v558
    %v1039 = vpop.f32.mrf.mxu0
    %v1040 = vadd.f32 %v803, %v1039
    %v1041 = vpop.f32.mrf.mxu0
    %v1042 = vadd.f32 %v807, %v1041
    %1043 = vmatprep.mubr.f32.mxu0 %v563
    %1044 = vmatmul.mubr.f32.gmra.mxu0 %v562
    %v1045 = vpop.f32.mrf.mxu0
    %v1046 = vadd.f32 %v803, %v1045
    %v1047 = vpop.f32.mrf.mxu0
    %v1048 = vadd.f32 %v807, %v1047
    %1049 = vdwg.mxu0
    %1050 = vmatprep.subr.mxu0 %v757
    %1051 = vmatpush1.msra.mxu0 %v756
    %1052 = vmatprep.subr.mxu0 %v753
    %1053 = vmatpush1.msra.mxu0 %v752
    %1054 = vmatprep.subr.mxu0 %v749
    %1055 = vmatpush1.msra.mxu0 %v748
    %1056 = vmatprep.subr.mxu0 %v745
    %1057 = vmatpush1.msra.mxu0 %v744
    %1058 = vmatprep.subr.mxu0 %v741
    %1059 = vmatpush1.msra.mxu0 %v740
    %1060 = vmatprep.subr.mxu0 %v737
    %1061 = vmatpush1.msra.mxu0 %v736
    %1062 = vmatprep.subr.mxu0 %v733
    %1063 = vmatpush1.msra.mxu0 %v732
    %1064 = vmatprep.subr.mxu0 %v729
    %1065 = vmatpush1.msra.mxu0 %v728
    %1066 = vmatprep.subr.mxu0 %v725
    %1067 = vmatpush1.msra.mxu0 %v724
    %1068 = vmatprep.subr.mxu0 %v721
    %1069 = vmatpush1.msra.mxu0 %v720
    %1070 = vmatprep.subr.mxu0 %v717
    %1071 = vmatpush1.msra.mxu0 %v716
    %1072 = vmatprep.subr.mxu0 %v713
    %1073 = vmatpush1.msra.mxu0 %v712
    %1074 = vmatprep.subr.mxu0 %v709
    %1075 = vmatpush1.msra.mxu0 %v708
    %1076 = vmatprep.subr.mxu0 %v705
    %1077 = vmatpush1.msra.mxu0 %v704
    %1078 = vmatprep.subr.mxu0 %v701
    %1079 = vmatpush1.msra.mxu0 %v700
    %1080 = vmatprep.subr.mxu0 %v697
    %1081 = vmatpush1.msra.mxu0 %v696
    %1082 = vmatprep.subr.mxu0 0.0
    %1083 = vmatpush2.msra.mxu0 0.0
    %1084 = vmatprep.subr.mxu0 0.0
    %1085 = vmatpush2.msra.mxu0 0.0
    %1086 = vmatprep.subr.mxu0 0.0
    %1087 = vmatpush2.msra.mxu0 0.0
    %1088 = vmatprep.subr.mxu0 0.0
    %1089 = vmatpush2.msra.mxu0 0.0
    %1090 = vmatprep.subr.mxu0 0.0
    %1091 = vmatpush2.msra.mxu0 0.0
    %1092 = vmatprep.subr.mxu0 0.0
    %1093 = vmatpush2.msra.mxu0 0.0
    %1094 = vmatprep.subr.mxu0 0.0
    %1095 = vmatpush2.msra.mxu0 0.0
    %1096 = vmatprep.subr.mxu0 0.0
    %1097 = vmatpush2.msra.mxu0 0.0
    %1098 = vmatprep.subr.mxu0 %v789
    %1099 = vmatpush2.msra.mxu0 %v788
    %1100 = vmatprep.subr.mxu0 %v785
    %1101 = vmatpush2.msra.mxu0 %v784
    %1102 = vmatprep.subr.mxu0 %v781
    %1103 = vmatpush2.msra.mxu0 %v780
    %1104 = vmatprep.subr.mxu0 %v777
    %1105 = vmatpush2.msra.mxu0 %v776
    %1106 = vmatprep.subr.mxu0 %v773
    %1107 = vmatpush2.msra.mxu0 %v772
    %1108 = vmatprep.subr.mxu0 %v769
    %1109 = vmatpush2.msra.mxu0 %v768
    %1110 = vmatprep.subr.mxu0 %v765
    %1111 = vmatpush2.msra.mxu0 %v764
    %1112 = vmatprep.subr.mxu0 %v761
    %1113 = vmatpush2.msra.mxu0 %v760
    %1114 = vmatprep.mubr.f32.mxu0 %v814
    %1115 = vmatmul.mubr.f32.gmra.mxu0 %v560
    %v1116 = vpop.f32.mrf.mxu0
    %v1117 = vadd.f32 %v1040, %v1116
    %v1118 = vpop.f32.mrf.mxu0
    %v1119 = vadd.f32 %v1042, %v1118
    %1120 = vmatprep.mubr.f32.mxu0 %v817
    %1121 = vmatmul.mubr.f32.gmra.mxu0 %v564
    %v1122 = vpop.f32.mrf.mxu0
    %v1123 = vadd.f32 %v1046, %v1122
    %v1124 = vpop.f32.mrf.mxu0
    %v1125 = vadd.f32 %v1048, %v1124
    %1126 = vdwg.mxu0
    %v1127 = vmax.f32 %v963, 0.0
    %v1128 = vmax.f32 %v965, 0.0
    %v1129 = vmax.f32 %v1117, 0.0
    %v1130 = vmax.f32 %v1119, 0.0
    %v1131 = vmax.f32 %v969, 0.0
    %v1132 = vmax.f32 %v971, 0.0
    %v1133 = vmax.f32 %v1123, 0.0
    %v1134 = vmax.f32 %v1125, 0.0
    %v1135 = vstv %s25
    %v1136 = vmul.f32 %v1135, %v558
    %v1137 = vmul.f32 %v1135, %v559
    %v1138 = vmul.f32 %v1135, %v560
    %v1139 = vmul.f32 %v1135, %v561
    %v1140 = vmul.f32 %v1135, %v562
    %v1141 = vmul.f32 %v1135, %v563
    %v1142 = vmul.f32 %v1135, %v564
    %v1143 = vmul.f32 %v1135, %v565
    %s1144 = ssub.f32 1.0, %s25
    %v1145 = vstv %s1144
    %v1146 = vmul.f32 %v1145, %v1127
    %v1147 = vmul.f32 %v1145, %v1128
    %v1148 = vmul.f32 %v1145, %v1129
    %v1149 = vmul.f32 %v1145, %v1130
    %v1150 = vmul.f32 %v1145, %v1131
    %v1151 = vmul.f32 %v1145, %v1132
    %v1152 = vmul.f32 %v1145, %v1133
    %v1153 = vmul.f32 %v1145, %v1134
    %v1154 = vadd.f32 %v1136, %v1146
    %v1155 = vadd.f32 %v1137, %v1147
    %v1156 = vadd.f32 %v1138, %v1148
    %v1157 = vadd.f32 %v1139, %v1149
    %v1158 = vadd.f32 %v1140, %v1150
    %v1159 = vadd.f32 %v1141, %v1151
    %v1160 = vadd.f32 %v1142, %v1152
    %v1161 = vadd.f32 %v1143, %v1153
    %1162 = vst [vmem:[#allocation3] sm:$0xff] %v1154
    %1163 = vst [vmem:[#allocation3 + $0x8] sm:$0xff] %v1155
    %1164 = vst [vmem:[#allocation3 + $0x10] sm:$0xff] %v1156
    %1165 = vst.msk [vmem:[#allocation3 + $0x18] sm:$0xff] %vm812, %v1157
    %1166 = vst [vmem:[#allocation3 + $0x20] sm:$0xff] %v1158
    %1167 = vst [vmem:[#allocation3 + $0x28] sm:$0xff] %v1159
    %1168 = vst [vmem:[#allocation3 + $0x30] sm:$0xff] %v1160
    %1169 = vst.msk [vmem:[#allocation3 + $0x38] sm:$0xff] %vm812, %v1161
    // Predicated region
    $region26: #{tpu_custom_call.1} parent=1 // pred_check
      _
    $region27: #{tpu_custom_call.1} parent=1 // pred_check_branch
      %1171 = sbr.rel (0) target = $region29
    $region28: #{tpu_custom_call.1} parent=1 // pred_region
      %s1173 = ssub.s32 1024, 1024
      %1174 = vsyncadd [#allocation4], %s1173
      %s1175 = sshll.u32 [#allocation3], 4
      %s1176 = int_to_ptr.vmem [resolvable:$true] %s1175
      %1181 = dma.vmem_to_hbm [thread:$0]  %s1176, 1024, %s6, [#allocation4], 512, 512, 32
    $region29: #{tpu_custom_call.1} parent=1 // pred_fallthru
      _
    // Predicated region
    $region30: #{tpu_custom_call.1} parent=1 // pred_check
      _
    $region31: #{tpu_custom_call.1} parent=1 // pred_check_branch
      %1183 = sbr.rel (0) target = $region33
    $region32: #{tpu_custom_call.1} parent=1 // pred_region
      %1184 = dma.done [#allocation4], 1024
    $region33: #{tpu_custom_call.1} parent=1 // pred_fallthru
      _
    %1185 = vsyncpa [#allocation4], 1

</llo_original>
